<compile_context>
chip_gen: v7x
topology: tpu7x:2x2x1
jax: 0.10.0
libtpu: 0.0.40
codegen_flags: <defaults>
</compile_context>

<pallas_src>
import functools
from typing import NamedTuple, Optional

import jax
import jax.numpy as jnp
from jax.experimental import pallas as pl
from jax.experimental.pallas import tpu as pltpu


_VMEM_BUDGET_BYTES = 28 * 1024 * 1024   # v7x-safe double-buffered footprint
_VMEM_LIMIT_BYTES = 32 * 1024 * 1024    # explicit scoped-VMEM limit


def _round_up(x: int, mult: int) -> int:
    return ((x + mult - 1) // mult) * mult


class GeneratorPlan(NamedTuple):
    """Static tiling plan (hashable so it can be a jit static arg)."""
    tm_cap: int   # M-tile upper bound; actual tm = min(m, tm_cap) per call
    tn: int
    tk: int
    n_pad: int
    k_pad: int


def plan_generator(d_model: int, n_vocab: int, *,
                   x_itemsize: int, w_itemsize: int, out_itemsize: int,
                   block_m: int = 512, block_n: int = 1024, block_k: int = 2048,
                   vmem_budget: int = _VMEM_BUDGET_BYTES) -> GeneratorPlan:
    """Pick tiles: as large as possible while fitting the v7x-safe VMEM budget."""
    tm = block_m
    tn = n_vocab if n_vocab <= block_n else block_n
    tk = d_model if d_model <= block_k else block_k   # collapse K if it fits

    def footprint(tm, tn, tk):
        k_split = tk < d_model
        buf = 2 * (tm * tk * x_itemsize         # X   (double-buffered)
                   + tk * tn * w_itemsize       # W   (double-buffered)
                   + tn * 4                     # bias (f32)
                   + tm * tn * out_itemsize)    # out (double-buffered)
        if k_split:
            buf += tm * tn * 4                  # f32 accumulator scratch
        return buf

    # Shrink (largest first) until double-buffered footprint fits the budget.
    # Guards keep every resulting tile a legal (8,128)-aligned block.
    while footprint(tm, tn, tk) > vmem_budget:
        if tm > 256 and tm % 16 == 0:
            tm //= 2
        elif tn > 512 and tn % 256 == 0:
            tn //= 2
        elif tk > 512 and tk % 256 == 0:
            tk //= 2
        else:
            break

    n_pad = n_vocab if n_vocab <= tn else _round_up(n_vocab, tn)
    k_pad = d_model if d_model <= tk else _round_up(d_model, tk)
    return GeneratorPlan(tm_cap=tm, tn=tn, tk=tk, n_pad=n_pad, k_pad=k_pad)


def prepare_generator_weights(w, b, plan: GeneratorPlan,
                              compute_dtype: Optional[jnp.dtype] = None):
    """Pad (and optionally cast) the projection weight/bias ONCE.

    Call this at parameter-setup time so the per-token forward never re-pads
    or re-casts the (large) weight matrix in HBM.
    """
    d_model, n_vocab = w.shape
    if plan.k_pad != d_model or plan.n_pad != n_vocab:
        w = jnp.pad(w, ((0, plan.k_pad - d_model), (0, plan.n_pad - n_vocab)))
    if compute_dtype is not None:
        w = w.astype(compute_dtype)
    b2 = b.reshape(1, n_vocab).astype(jnp.float32)
    if plan.n_pad != n_vocab:
        b2 = jnp.pad(b2, ((0, 0), (0, plan.n_pad - n_vocab)))
    return w, b2


# ----------------------------- kernels --------------------------------------


def _kernel_single_k(x_ref, w_ref, b_ref, o_ref):
    # K fits one tile: single MXU pass, no accumulator, no pl.when.
    acc = jnp.dot(x_ref[...], w_ref[...], preferred_element_type=jnp.float32)
    o_ref[...] = (acc + b_ref[...]).astype(o_ref.dtype)


def _kernel_ksplit_f32_out(x_ref, w_ref, b_ref, o_ref):
    # K split, f32 output: accumulate directly in the resident output block
    # (no scratch; saves tm*tn*4 bytes of VMEM and the extra RMW stream).
    k = pl.program_id(2)

    @pl.when(k == 0)
    def _():
        o_ref[...] = jnp.broadcast_to(b_ref[...], o_ref.shape)

    o_ref[...] += jnp.dot(x_ref[...], w_ref[...],
                          preferred_element_type=jnp.float32)


def _kernel_ksplit_acc(x_ref, w_ref, b_ref, o_ref, acc_ref):
    # General K split (non-f32 output): f32 VMEM accumulator across K.
    k = pl.program_id(2)

    @pl.when(k == 0)
    def _():
        acc_ref[...] = jnp.zeros_like(acc_ref)

    acc_ref[...] += jnp.dot(x_ref[...], w_ref[...],
                            preferred_element_type=jnp.float32)

    @pl.when(k == pl.num_programs(2) - 1)
    def _():
        o_ref[...] = (acc_ref[...] + b_ref[...]).astype(o_ref.dtype)


# ------------------------------ forward -------------------------------------


@functools.partial(
    jax.jit,
    static_argnames=("plan", "n_vocab", "compute_dtype", "out_dtype"))
def generator_apply(x, w_prepared, b_prepared, *, plan: GeneratorPlan,
                    n_vocab: int, compute_dtype=None, out_dtype=None):
    """Jitted forward on already prepared (padded / cast) weight & bias.

    x: (..., d_model)
    w_prepared: (k_pad, n_pad)   b_prepared: (1, n_pad) f32
    returns: (..., n_vocab)
    """
    *lead, d_model = x.shape
    out_dt = jnp.dtype(out_dtype if out_dtype is not None else x.dtype)
    tn, tk = plan.tn, plan.tk
    n_pad, k_pad = plan.n_pad, plan.k_pad

    x2 = x.reshape(-1, d_model)
    m = x2.shape[0]
    tm = m if m <= plan.tm_cap else plan.tm_cap
    m_pad = m if m <= plan.tm_cap else _round_up(m, tm)

    if m_pad != m or k_pad != d_model:
        x2 = jnp.pad(x2, ((0, m_pad - m), (0, k_pad - d_model)))
    if compute_dtype is not None:
        x2 = x2.astype(compute_dtype)

    m_blocks = m_pad // tm
    n_blocks = n_pad // tn
    k_blocks = k_pad // tk

    cost = pl.CostEstimate(
        flops=2 * m_pad * k_pad * n_pad,
        transcendentals=0,
        bytes_accessed=(
            x2.size * x2.dtype.itemsize * n_blocks                    # X per N tile
            + w_prepared.size * w_prepared.dtype.itemsize * m_blocks  # W per M tile
            + b_prepared.size * b_prepared.dtype.itemsize * m_blocks
            + m_pad * n_pad * out_dt.itemsize))

    if k_blocks == 1:
        grid = (m_blocks, n_blocks)
        dims = ("parallel", "parallel")
        in_specs = [
            pl.BlockSpec((tm, tk), lambda i, j: (i, 0)),   # X tile
            pl.BlockSpec((tk, tn), lambda i, j: (0, j)),   # W tile
            pl.BlockSpec((1, tn), lambda i, j: (0, j)),    # bias tile
        ]
        out_specs = pl.BlockSpec((tm, tn), lambda i, j: (i, j))
        kernel = _kernel_single_k
        scratch_shapes = []
    else:
        grid = (m_blocks, n_blocks, k_blocks)
        dims = ("parallel", "parallel", "arbitrary")
        in_specs = [
            pl.BlockSpec((tm, tk), lambda i, j, k: (i, k)),
            pl.BlockSpec((tk, tn), lambda i, j, k: (k, j)),
            pl.BlockSpec((1, tn), lambda i, j, k: (0, j)),
        ]
        out_specs = pl.BlockSpec((tm, tn), lambda i, j, k: (i, j))
        if out_dt == jnp.dtype(jnp.float32):
            kernel = _kernel_ksplit_f32_out
            scratch_shapes = []
        else:
            kernel = _kernel_ksplit_acc
            scratch_shapes = [pltpu.VMEM((tm, tn), jnp.float32)]

    out = pl.pallas_call(
        kernel,
        out_shape=jax.ShapeDtypeStruct((m_pad, n_pad), out_dt),
        grid_spec=pltpu.PrefetchScalarGridSpec(
            num_scalar_prefetch=0,
            grid=grid,
            in_specs=in_specs,
            out_specs=out_specs,
            scratch_shapes=scratch_shapes),
        compiler_params=pltpu.CompilerParams(
            dimension_semantics=dims,
            vmem_limit_bytes=_VMEM_LIMIT_BYTES),
        cost_estimate=cost,
    )(x2, w_prepared, b_prepared)

    out = out[:m, :n_vocab]
    return out.reshape(*lead, n_vocab)


def generator_forward(x, w, b, *, block_m=512, block_n=1024, block_k=2048,
                      compute_dtype=None, out_dtype=None):
    """Convenience one-shot forward (pads/casts W per call).

    For a production LM head, build the plan + prepared weights once with
    plan_generator / prepare_generator_weights and call generator_apply
    repeatedly (weight pad/cast is then fully hoisted off the forward path).
    """
    d_model, n_vocab = w.shape
    out_dt = jnp.dtype(out_dtype if out_dtype is not None else x.dtype)
    x_isz = jnp.dtype(compute_dtype).itemsize if compute_dtype else x.dtype.itemsize
    w_isz = jnp.dtype(compute_dtype).itemsize if compute_dtype else w.dtype.itemsize
    plan = plan_generator(d_model, n_vocab,
                          x_itemsize=x_isz, w_itemsize=w_isz,
                          out_itemsize=out_dt.itemsize,
                          block_m=block_m, block_n=block_n, block_k=block_k)
    w_p, b_p = prepare_generator_weights(w, b, plan, compute_dtype=compute_dtype)
    return generator_apply(x, w_p, b_p, plan=plan, n_vocab=n_vocab,
                           compute_dtype=compute_dtype, out_dtype=out_dtype)


if __name__ == "__main__":
    # Small shapes consistent with the module: batch=2, seq=8, d_model=32,
    # n_vocab=128.
    batch, seq, d_model, n_vocab = 2, 8, 32, 128

    key = jax.random.PRNGKey(0)
    kx, kw, kb = jax.random.split(key, 3)

    x = jax.random.normal(kx, (batch, seq, d_model), dtype=jnp.float32)
    # PyTorch weight shape is (n_vocab, d_model); we store its transpose.
    w = (jax.random.normal(kw, (d_model, n_vocab), dtype=jnp.float32)
         * (1.0 / jnp.sqrt(d_model)))
    b = jax.random.normal(kb, (n_vocab,), dtype=jnp.float32) * 0.01

    # 1) Main check (single-K fast path, f32, tight tolerance).
    y = generator_forward(x, w, b)
    jax.block_until_ready(y)
    y_ref = x @ w + b
    assert y.shape == (batch, seq, n_vocab), y.shape
    assert jnp.allclose(y, y_ref, atol=1e-5, rtol=1e-5), (
        float(jnp.max(jnp.abs(y - y_ref))))

    # 2) Multi-block M/N/K with small blocks: exercises the K-split
    #    direct-into-output (f32) path.
    d2, v2 = 256, 512
    k2x, k2w, k2b = jax.random.split(jax.random.PRNGKey(1), 3)
    x2 = jax.random.normal(k2x, (batch, seq, d2), dtype=jnp.float32)
    w2 = (jax.random.normal(k2w, (d2, v2), dtype=jnp.float32)
          * (1.0 / jnp.sqrt(d2)))
    b2 = jax.random.normal(k2b, (v2,), dtype=jnp.float32) * 0.01
    y2 = generator_forward(x2, w2, b2, block_m=8, block_n=128, block_k=128)
    jax.block_until_ready(y2)
    y2_ref = x2 @ w2 + b2
    assert y2.shape == (batch, seq, v2), y2.shape
    assert jnp.allclose(y2, y2_ref, atol=1e-2, rtol=1e-2), (
        float(jnp.max(jnp.abs(y2 - y2_ref))))

    # 2b) Same shapes but bf16 output: exercises the K-split accumulator path.
    y2b = generator_forward(x2, w2, b2, block_m=8, block_n=128, block_k=128,
                            out_dtype=jnp.bfloat16)
    jax.block_until_ready(y2b)
    assert jnp.allclose(y2b.astype(jnp.float32), y2_ref, atol=5e-2, rtol=5e-2), (
        float(jnp.max(jnp.abs(y2b.astype(jnp.float32) - y2_ref))))

    # 3) Production path: weights prepared (padded + bf16-cast) ONCE, then the
    #    jitted apply is called with the prepared params (looser tolerance).
    plan = plan_generator(d_model, n_vocab, x_itemsize=2, w_itemsize=2,
                          out_itemsize=4)
    w_p, b_p = prepare_generator_weights(w, b, plan,
                                         compute_dtype=jnp.bfloat16)
    y3 = generator_apply(x, w_p, b_p, plan=plan, n_vocab=n_vocab,
                         compute_dtype=jnp.bfloat16)
    jax.block_until_ready(y3)
    assert jnp.allclose(y3, y_ref, atol=1e-1, rtol=1e-1), (
        float(jnp.max(jnp.abs(y3 - y_ref))))

    print("KERNEL_OK")
</pallas_src>

<mosaic_0001>
module attributes {stable_mosaic.version = 11 : i64} {
  func.func @_kernel_single_k(%arg0: i32, %arg1: i32, %arg2: memref<16x32xf32, #tpu.memory_space<vmem>>, %arg3: memref<32x128xf32, #tpu.memory_space<vmem>>, %arg4: memref<1x128xf32, #tpu.memory_space<vmem>>, %arg5: memref<16x128xf32, #tpu.memory_space<vmem>>) attributes {dimension_semantics = [#tpu.dimension_semantics<parallel>, #tpu.dimension_semantics<parallel>], iteration_bounds = array<i64: 1, 1>, scalar_prefetch = 0 : i64, scratch_operands = 0 : i64, tpu.core_type = #tpu.core_type<tc>, window_params = [{transform_indices = @transform_0, window_bounds = array<i64: 16, 32>}, {transform_indices = @transform_1, window_bounds = array<i64: 32, 128>}, {transform_indices = @transform_2, window_bounds = array<i64: 1, 128>}, {transform_indices = @transform_3, window_bounds = array<i64: 16, 128>}]} {
    %c0 = arith.constant 0 : index
    %c0_0 = arith.constant 0 : index
    %0 = vector.load %arg2[%c0, %c0_0] : memref<16x32xf32, #tpu.memory_space<vmem>>, vector<16x32xf32>
    %c0_1 = arith.constant 0 : index
    %c0_2 = arith.constant 0 : index
    %1 = vector.load %arg3[%c0_1, %c0_2] : memref<32x128xf32, #tpu.memory_space<vmem>>, vector<32x128xf32>
    %cst = arith.constant dense<0.000000e+00> : vector<16x128xf32>
    %2 = tpu.matmul %0, %1, %cst {dimension_numbers = #tpu.dot_dimension_numbers<[1], [0], [0], [1], [0, 0, 1, 1], [], []>} : vector<16x32xf32>, vector<32x128xf32>, vector<16x128xf32> -> vector<16x128xf32>
    %c0_3 = arith.constant 0 : index
    %c0_4 = arith.constant 0 : index
    %3 = vector.load %arg4[%c0_3, %c0_4] : memref<1x128xf32, #tpu.memory_space<vmem>>, vector<1x128xf32>
    %4 = vector.broadcast %3 : vector<1x128xf32> to vector<16x128xf32>
    %5 = arith.addf %2, %4 : vector<16x128xf32>
    %c0_5 = arith.constant 0 : index
    %c0_6 = arith.constant 0 : index
    %6 = vector.load %arg5[%c0_5, %c0_6] : memref<16x128xf32, #tpu.memory_space<vmem>>, vector<16x128xf32>
    tpu.vector_store %arg5[%c0_5, %c0_6], %5 {strides = array<i32>} : memref<16x128xf32, #tpu.memory_space<vmem>>, vector<16x128xf32>,
    return
  }
  func.func @transform_0(%arg0: i32, %arg1: i32) -> (i32, i32) {
    %c0_i32 = arith.constant 0 : i32
    %c0_i32_0 = arith.constant 0 : i32
    return %arg0, %c0_i32 : i32, i32
  }
  func.func @transform_1(%arg0: i32, %arg1: i32) -> (i32, i32) {
    %c0_i32 = arith.constant 0 : i32
    %c0_i32_0 = arith.constant 0 : i32
    return %c0_i32, %arg1 : i32, i32
  }
  func.func @transform_2(%arg0: i32, %arg1: i32) -> (i32, i32) {
    %c0_i32 = arith.constant 0 : i32
    %c0_i32_0 = arith.constant 0 : i32
    return %c0_i32, %arg1 : i32, i32
  }
  func.func @transform_3(%arg0: i32, %arg1: i32) -> (i32, i32) {
    %c0_i32 = arith.constant 0 : i32
    return %arg0, %arg1 : i32, i32
  }
}

</mosaic_0001>

<llo_original>
// kernel: generator_apply.1
$region0: #{generator_apply.1}
  #allocation0 [shape = 'u32[]', space=smem, size = 0x4, offset = 0x4, fixed_abs, tag = 'smem constant byte address 0x4 - core index']
  #allocation1 [shape = 'u32[144,128]{1,0:T(1,128)}', space=vmem, size = 0x12000, scoped, tag = 'internal scratch']
  %s0 = inlined_call_operand.hbm [shape: f32[16,32], index: 0, kind: input, shape index: {}]
  %s1 = inlined_call_operand.hbm [shape: f32[32,128], index: 1, kind: input, shape index: {}]
  %s2 = inlined_call_operand.vmem [shape: f32[1,128], index: 2, kind: input, shape index: {}]
  %s3 = inlined_call_operand.hbm [shape: f32[16,128], index: 3, kind: output, shape index: {}]
  %s4 = sld [smem:[#allocation0]]
  $region30: #{generator_apply.1} parent=0
    _
  %s6 = ssub.s32 1, %s4
  %s7 = scalar_select 0, %s6, %s4
  $region1: #{generator_apply.1} parent=0
    #allocation2 [shape = 'u8[8192]{0}', space=vmem, size = 0x2000, scoped, tag = 'input window, operand 0, single buffered']
    #allocation3 [shape = 's32[1]{0}', space=sflag, size = 0x4, scoped, tag = 'scoped memory for generator_apply.1']
    #allocation4 [shape = 's32[1]{0}', space=sflag, size = 0x4, scoped, tag = 'scoped memory for generator_apply.1']
    #allocation5 [shape = 'u8[16384]{0}', space=vmem, size = 0x4000, scoped, tag = 'input window, operand 1, single buffered']
    #allocation6 [shape = 's32[1]{0}', space=sflag, size = 0x4, scoped, tag = 'scoped memory for generator_apply.1']
    #allocation7 [shape = 'u8[8192]{0}', space=vmem, size = 0x2000, scoped, tag = 'output window, operand 0, single buffered']
    %8 = vsyncpa [#allocation3], 0
    %9 = vsyncpa [#allocation6], 0
    %10 = vsyncpa [#allocation4], 0
    // Predicated region
    $region2: #{generator_apply.1} parent=1 // pred_check
      _
    $region3: #{generator_apply.1} parent=1 // pred_check_branch
      %12 = sbr.rel (0) target = $region5
    $region4: #{generator_apply.1} parent=1 // pred_region
      %s14 = ssub.s32 256, 256
      %15 = vsyncadd [#allocation3], %s14
      %s16 = sshll.u32 [#allocation2], 4
      %s17 = int_to_ptr.vmem [resolvable:$true] %s16
      %22 = dma.hbm_to_vmem [thread:$0]  %s0, 256, %s17, [#allocation3], 128, 128, 8
    $region5: #{generator_apply.1} parent=1 // pred_fallthru
      _
    // Predicated region
    $region6: #{generator_apply.1} parent=1 // pred_check
      _
    $region7: #{generator_apply.1} parent=1 // pred_check_branch
      %24 = sbr.rel (0) target = $region9
    $region8: #{generator_apply.1} parent=1 // pred_region
      %s26 = ssub.s32 512, 512
      %27 = vsyncadd [#allocation6], %s26
      %s28 = sshll.u32 [#allocation5], 4
      %s29 = int_to_ptr.vmem [resolvable:$true] %s28
      %34 = dma.hbm_to_vmem [thread:$0]  %s1, 512, %s29, [#allocation6], 128, 128, 8
    $region9: #{generator_apply.1} parent=1 // pred_fallthru
      _
    // Predicated region
    $region10: #{generator_apply.1} parent=1 // pred_check
      _
    $region11: #{generator_apply.1} parent=1 // pred_check_branch
      %36 = sbr.rel (0) target = $region13
    $region12: #{generator_apply.1} parent=1 // pred_region
      _
    $region13: #{generator_apply.1} parent=1 // pred_fallthru
      _
    // Predicated region
    $region14: #{generator_apply.1} parent=1 // pred_check
      _
    $region15: #{generator_apply.1} parent=1 // pred_check_branch
      %38 = sbr.rel (0) target = $region17
    $region16: #{generator_apply.1} parent=1 // pred_region
      %39 = dma.done [#allocation3], 256
    $region17: #{generator_apply.1} parent=1 // pred_fallthru
      _
    // Predicated region
    $region18: #{generator_apply.1} parent=1 // pred_check
      _
    $region19: #{generator_apply.1} parent=1 // pred_check_branch
      %41 = sbr.rel (0) target = $region21
    $region20: #{generator_apply.1} parent=1 // pred_region
      %42 = dma.done [#allocation6], 512
    $region21: #{generator_apply.1} parent=1 // pred_fallthru
      _
    %v43 = vld [vmem:[#allocation2] sm:$0xff]
    %v44 = vld [vmem:[#allocation2 + $0x8] sm:$0xff]
    %v45 = vld [vmem:[#allocation5] sm:$0xff]
    %v46 = vld [vmem:[#allocation5 + $0x8] sm:$0xff]
    %v47 = vld [vmem:[#allocation5 + $0x10] sm:$0xff]
    %v48 = vld [vmem:[#allocation5 + $0x18] sm:$0xff]
    %v49 = vld [vmem:[%s2] sm:$0x1]
    %v51 = vlaneseq
    %v52 = vshrl.u32 %v51, 7
    %v53 = vsub.s32 0, %v52
    %v54 = vrot.slane %v49, %v53
    %vm56 = vcmask 261120
    %v58 = vsel %vm56, %v43, 0
    %v61 = vsel %vm56, %v44, 0
    %63 = vmatprep.subr.mxu0 0.0
    %64 = vmatpush1.msra.mxu0 %v45
    %65 = vmatprep.subr.mxu0 0.0
    %66 = vmatpush1.msra.mxu0 %v46
    %67 = vmatprep.subr.mxu0 0.0
    %68 = vmatpush1.msra.mxu0 %v47
    %69 = vmatprep.subr.mxu0 0.0
    %70 = vmatpush1.msra.mxu0 %v48
    %71 = vmatprep.subr.mxu0 0.0
    %72 = vmatpush1.msra.mxu0 0.0
    %73 = vmatprep.subr.mxu0 0.0
    %74 = vmatpush1.msra.mxu0 0.0
    %75 = vmatprep.subr.mxu0 0.0
    %76 = vmatpush1.msra.mxu0 0.0
    %77 = vmatprep.subr.mxu0 0.0
    %78 = vmatpush1.msra.mxu0 0.0
    %79 = vmatprep.subr.mxu0 0.0
    %80 = vmatpush1.msra.mxu0 0.0
    %81 = vmatprep.subr.mxu0 0.0
    %82 = vmatpush1.msra.mxu0 0.0
    %83 = vmatprep.subr.mxu0 0.0
    %84 = vmatpush1.msra.mxu0 0.0
    %85 = vmatprep.subr.mxu0 0.0
    %86 = vmatpush1.msra.mxu0 0.0
    %87 = vmatprep.subr.mxu0 0.0
    %88 = vmatpush1.msra.mxu0 0.0
    %89 = vmatprep.subr.mxu0 0.0
    %90 = vmatpush1.msra.mxu0 0.0
    %91 = vmatprep.subr.mxu0 0.0
    %92 = vmatpush1.msra.mxu0 0.0
    %93 = vmatprep.subr.mxu0 0.0
    %94 = vmatpush1.msra.mxu0 0.0
    %95 = vmatprep.subr.mxu0 0.0
    %96 = vmatpush1.msra.mxu0 0.0
    %97 = vmatprep.subr.mxu0 0.0
    %98 = vmatpush1.msra.mxu0 0.0
    %99 = vmatprep.subr.mxu0 0.0
    %100 = vmatpush1.msra.mxu0 0.0
    %101 = vmatprep.subr.mxu0 0.0
    %102 = vmatpush1.msra.mxu0 0.0
    %103 = vmatprep.subr.mxu0 0.0
    %104 = vmatpush1.msra.mxu0 0.0
    %105 = vmatprep.subr.mxu0 0.0
    %106 = vmatpush1.msra.mxu0 0.0
    %107 = vmatprep.subr.mxu0 0.0
    %108 = vmatpush1.msra.mxu0 0.0
    %109 = vmatprep.subr.mxu0 0.0
    %110 = vmatpush1.msra.mxu0 0.0
    %111 = vmatprep.subr.mxu0 0.0
    %112 = vmatpush1.msra.mxu0 0.0
    %113 = vmatprep.subr.mxu0 0.0
    %114 = vmatpush1.msra.mxu0 0.0
    %115 = vmatprep.subr.mxu0 0.0
    %116 = vmatpush1.msra.mxu0 0.0
    %117 = vmatprep.subr.mxu0 0.0
    %118 = vmatpush1.msra.mxu0 0.0
    %119 = vmatprep.subr.mxu0 0.0
    %120 = vmatpush1.msra.mxu0 0.0
    %121 = vmatprep.subr.mxu0 0.0
    %122 = vmatpush1.msra.mxu0 0.0
    %123 = vmatprep.subr.mxu0 0.0
    %124 = vmatpush1.msra.mxu0 0.0
    %125 = vmatprep.subr.mxu0 0.0
    %126 = vmatpush1.msra.mxu0 0.0
    %127 = vmatprep.mubr.f32.mxu0 0.0
    %128 = vmatmul.mubr.f32.gmra.mrb[0].mxu0 %v58
    %v129 = vpop.f32.mrb[0].mxu0
    %v130 = vadd.f32 %v54, %v129
    %v131 = vpop.f32.mrb[0].mxu0
    %132 = vmatprep.mubr.f32.mxu0 0.0
    %133 = vmatmul.mubr.f32.gmra.mrb[0].mxu0 %v61
    %v134 = vpop.f32.mrb[0].mxu0
    %v135 = vadd.f32 %v54, %v134
    %v136 = vpop.f32.mrb[0].mxu0
    %137 = vdwg.mxu0
    %138 = vst [vmem:[#allocation7] sm:$0xff] %v130
    %139 = vst [vmem:[#allocation7 + $0x8] sm:$0xff] %v135
    // Predicated region
    $region22: #{generator_apply.1} parent=1 // pred_check
      _
    $region23: #{generator_apply.1} parent=1 // pred_check_branch
      %141 = sbr.rel (0) target = $region25
    $region24: #{generator_apply.1} parent=1 // pred_region
      %s143 = ssub.s32 256, 256
      %144 = vsyncadd [#allocation4], %s143
      %s145 = sshll.u32 [#allocation7], 4
      %s146 = int_to_ptr.vmem [resolvable:$true] %s145
      %151 = dma.vmem_to_hbm [thread:$0]  %s146, 256, %s3, [#allocation4], 128, 128, 8
    $region25: #{generator_apply.1} parent=1 // pred_fallthru
      _
    // Predicated region
    $region26: #{generator_apply.1} parent=1 // pred_check
      _
    $region27: #{generator_apply.1} parent=1 // pred_check_branch
      %153 = sbr.rel (0) target = $region29
    $region28: #{generator_apply.1} parent=1 // pred_region
      %154 = dma.done [#allocation4], 256
    $region29: #{generator_apply.1} parent=1 // pred_fallthru
      _
    %155 = vsyncpa [#allocation3], 1
    %156 = vsyncpa [#allocation6], 1
    %157 = vsyncpa [#allocation4], 1

</llo_original>
